<compile_context>
chip_gen: v6e
topology: v6e:2x2x1
jax: 0.10.0
libtpu: 0.0.40
codegen_flags: <defaults>
</compile_context>

<pallas_src>
import functools
import math

import jax
import jax.numpy as jnp
from jax import lax
from jax.experimental import pallas as pl
from jax.experimental.pallas import tpu as pltpu


def _pick_tile(dim, target, align):
    """Largest divisor of `dim` that is <= target and a multiple of `align`;
    falls back to the full dim (always a legal block size)."""
    if dim <= target:
        return dim
    t = (target // align) * align
    while t >= align:
        if dim % t == 0:
            return t
        t -= align
    return dim


# ----------------------------------------------------------------------------
# Kernel 1: tiled dense projection  out[M, O] = x[M, K] @ w[O, K]^T
# ----------------------------------------------------------------------------
def _proj_kernel(x_ref, w_ref, o_ref, acc_ref):
    @pl.when(pl.program_id(2) == 0)
    def _():
        acc_ref[...] = jnp.zeros_like(acc_ref)

    # Contract last dims: x[tm,tk] . w[tn,tk] -> [tm,tn].  The weight "transpose"
    # is folded into the MXU operand feed instead of a host-side w.T copy.
    acc_ref[...] += lax.dot_general(
        x_ref[...], w_ref[...],
        dimension_numbers=(((1,), (1,)), ((), ())),
        preferred_element_type=jnp.float32,
    )

    @pl.when(pl.program_id(2) == pl.num_programs(2) - 1)
    def _():
        o_ref[...] = acc_ref[...].astype(o_ref.dtype)


def linear_no_bias(x2d, w, *, tm_target=256, tn_target=256, tk_target=512):
    """x2d: [M, K], w: [O, K] (PyTorch Linear weight layout). Returns [M, O].

    256x256 output tiles with deep K suit v6e/v7x's 256-wide MXU; on v5e prefer
    tm_target=tn_target=128.  Per-step VMEM footprint (2 inputs x 2 buffers x
    tile + f32 accumulator) stays well under the 32 MiB scoped default on all
    generations, including v7x's 64 MiB VMEM.
    """
    M, K = x2d.shape
    O, K2 = w.shape
    assert K == K2
    tm = _pick_tile(M, tm_target, 8)     # second-minor dim: multiple of 8
    tn = _pick_tile(O, tn_target, 128)   # lane dim of output / 2nd-minor of w
    tk = _pick_tile(K, tk_target, 128)   # lane dim of both inputs
    grid = (M // tm, O // tn, K // tk)

    return pl.pallas_call(
        _proj_kernel,
        out_shape=jax.ShapeDtypeStruct((M, O), x2d.dtype),
        grid=grid,
        in_specs=[
            pl.BlockSpec((tm, tk), lambda i, j, k: (i, k)),
            pl.BlockSpec((tn, tk), lambda i, j, k: (j, k)),
        ],
        out_specs=pl.BlockSpec((tm, tn), lambda i, j, k: (i, j)),
        scratch_shapes=[pltpu.VMEM((tm, tn), jnp.float32)],
        compiler_params=pltpu.CompilerParams(
            dimension_semantics=("parallel", "parallel", "arbitrary")),
    )(x2d, w)


# ----------------------------------------------------------------------------
# Kernel 2: flash-style scaled dot-product attention.
# One batch element per grid step on the leading axis; all H heads handled per
# step with batched dot_generals.  Online softmax: running max m, running sum l,
# unnormalized f32 accumulator — all in VMEM scratch, persistent across the kv
# (reduction) grid axis.
# ----------------------------------------------------------------------------
def _flash_kernel(q_ref, k_ref, v_ref, o_ref, m_sc, l_sc, acc_sc, *, scale):
    kv = pl.program_id(2)

    @pl.when(kv == 0)
    def _():
        m_sc[...] = jnp.full(m_sc.shape, -jnp.inf, dtype=m_sc.dtype)
        l_sc[...] = jnp.zeros(l_sc.shape, dtype=l_sc.dtype)
        acc_sc[...] = jnp.zeros(acc_sc.shape, dtype=acc_sc.dtype)

    # [H, tq, C] / [H, tkv, C]
    q = q_ref[0] * scale          # fold 1/sqrt(C) into q: N*C mults, not N*N
    k = k_ref[0]
    v = v_ref[0]

    # scores [H, tq, tkv]: contract last dims -> no explicit k transpose (XLU-free).
    s = lax.dot_general(
        q, k,
        dimension_numbers=(((2,), (2,)), ((0,), (0,))),
        preferred_element_type=jnp.float32,
    )

    m_prev = m_sc[...]
    m_new = jnp.maximum(m_prev, jnp.max(s, axis=-1, keepdims=True))
    alpha = jnp.exp(m_prev - m_new)
    p = jnp.exp(s - m_new)                                     # [H, tq, tkv]
    l_sc[...] = alpha * l_sc[...] + jnp.sum(p, axis=-1, keepdims=True)

    # p @ v : [H, tq, tkv] x [H, tkv, C] -> [H, tq, C]
    # (on v6e/v7x with bf16 inputs, p.astype(v.dtype) feeds the MXU at bf16 rate)
    pv = lax.dot_general(
        p.astype(v.dtype), v,
        dimension_numbers=(((2,), (1,)), ((0,), (0,))),
        preferred_element_type=jnp.float32,
    )
    acc_sc[...] = alpha * acc_sc[...] + pv
    m_sc[...] = m_new

    @pl.when(kv == pl.num_programs(2) - 1)
    def _():
        # Normalize only the [H, tq, C] accumulator (never the [tq, tkv] probs).
        # approx=True (EUP) is fine for bf16 outputs; kept exact for the f32 check.
        inv_l = pl.reciprocal(l_sc[...], approx=False)
        o_ref[0] = (acc_sc[...] * inv_l).astype(o_ref.dtype)


def flash_sdpa(q, k, v, *, tq_target=128, tkv_target=128):
    """q, k, v: [B, H, N, C] -> [B, H, N, C]."""
    B, H, N, C = q.shape
    tq = _pick_tile(N, tq_target, 8)
    tkv = _pick_tile(N, tkv_target, 8)
    scale = 1.0 / math.sqrt(C)
    grid = (B, N // tq, N // tkv)

    q_spec = pl.BlockSpec((1, H, tq, C), lambda b, qi, ki: (b, 0, qi, 0))
    kv_spec = pl.BlockSpec((1, H, tkv, C), lambda b, qi, ki: (b, 0, ki, 0))
    o_spec = pl.BlockSpec((1, H, tq, C), lambda b, qi, ki: (b, 0, qi, 0))

    return pl.pallas_call(
        functools.partial(_flash_kernel, scale=scale),
        out_shape=jax.ShapeDtypeStruct((B, H, N, C), q.dtype),
        grid=grid,
        in_specs=[q_spec, kv_spec, kv_spec],
        out_specs=o_spec,
        scratch_shapes=[
            pltpu.VMEM((H, tq, 1), jnp.float32),   # running max
            pltpu.VMEM((H, tq, 1), jnp.float32),   # running sum
            pltpu.VMEM((H, tq, C), jnp.float32),   # unnormalized output accumulator
        ],
        compiler_params=pltpu.CompilerParams(
            dimension_semantics=("parallel", "parallel", "arbitrary")),
    )(q, k, v)


# ----------------------------------------------------------------------------
# Full forward pass (glue reshapes/transposes in plain JAX).
# ----------------------------------------------------------------------------
def multi_head_attention_forward(x, w_qkv, w_o, n_heads):
    """
    x     : [B, N, D]
    w_qkv : [3*D, D]  (PyTorch Linear weight for qkv_proj)
    w_o   : [D, D]    (PyTorch Linear weight for o_proj)
    """
    B, N, D = x.shape
    C = D // n_heads

    # qkv projection (tiled + pipelined, no host-side weight transpose)
    qkv = linear_no_bias(x.reshape(B * N, D), w_qkv)            # [B*N, 3*D]

    # rearrange 'b n (qkv h c) -> qkv b h n c'
    # TODO(synk): when C % 128 == 0 this transpose can be removed entirely by slicing
    # the [B, N, 3, H, C] projection output with per-q/k/v BlockSpec index_maps inside
    # flash_sdpa (saves one full HBM round trip of the activations).
    qkv = qkv.reshape(B, N, 3, n_heads, C)
    qkv = jnp.transpose(qkv, (2, 0, 3, 1, 4))                   # [3, B, H, N, C]
    q, k, v = qkv[0], qkv[1], qkv[2]

    attn = flash_sdpa(q, k, v)                                  # [B, H, N, C]

    # rearrange 'b h n c -> b n (h c)'
    attn = jnp.transpose(attn, (0, 2, 1, 3)).reshape(B, N, D)

    # output projection (o_drop is identity at inference)
    out = linear_no_bias(attn.reshape(B * N, D), w_o).reshape(B, N, D)
    return out


# ----------------------------------------------------------------------------
# Pure-JAX reference for a correctness check.
# ----------------------------------------------------------------------------
def _reference(x, w_qkv, w_o, n_heads):
    B, N, D = x.shape
    C = D // n_heads
    qkv = x @ w_qkv.T
    qkv = qkv.reshape(B, N, 3, n_heads, C)
    qkv = jnp.transpose(qkv, (2, 0, 3, 1, 4))
    q, k, v = qkv[0], qkv[1], qkv[2]
    s = jnp.einsum("bhnc,bhmc->bhnm", q, k) / math.sqrt(C)
    p = jax.nn.softmax(s, axis=-1)
    o = jnp.einsum("bhnm,bhmc->bhnc", p, v)
    o = jnp.transpose(o, (0, 2, 1, 3)).reshape(B, N, D)
    return o @ w_o.T


if __name__ == "__main__":
    B, N, dim, n_heads = 2, 8, 32, 4
    dropout_p = 0.0  # inference semantics

    key = jax.random.PRNGKey(0)
    kx, kqkv, ko = jax.random.split(key, 3)

    x = jax.random.normal(kx, (B, N, dim), dtype=jnp.float32)

    # nn.Linear default init: U(-1/sqrt(in_features), 1/sqrt(in_features))
    bound = 1.0 / math.sqrt(dim)
    w_qkv = jax.random.uniform(kqkv, (3 * dim, dim), jnp.float32, -bound, bound)
    w_o = jax.random.uniform(ko, (dim, dim), jnp.float32, -bound, bound)

    out = multi_head_attention_forward(x, w_qkv, w_o, n_heads)
    out = jax.block_until_ready(out)

    ref = _reference(x, w_qkv, w_o, n_heads)
    assert out.shape == (B, N, dim)
    assert jnp.allclose(out, ref, atol=1e-3, rtol=1e-3), "mismatch vs reference"

    print("KERNEL_OK")
</pallas_src>

<mosaic_0001>
module attributes {stable_mosaic.version = 11 : i64} {
  func.func @_proj_kernel(%arg0: i32, %arg1: i32, %arg2: i32, %arg3: memref<16x32xf32, #tpu.memory_space<vmem>>, %arg4: memref<96x32xf32, #tpu.memory_space<vmem>>, %arg5: memref<16x96xf32, #tpu.memory_space<vmem>>, %arg6: memref<16x96xf32, #tpu.memory_space<vmem>>) attributes {dimension_semantics = [#tpu.dimension_semantics<parallel>, #tpu.dimension_semantics<parallel>, #tpu.dimension_semantics<arbitrary>], iteration_bounds = array<i64: 1, 1, 1>, scalar_prefetch = 0 : i64, scratch_operands = 1 : i64, tpu.core_type = #tpu.core_type<tc>, window_params = [{transform_indices = @transform_0, window_bounds = array<i64: 16, 32>}, {transform_indices = @transform_1, window_bounds = array<i64: 96, 32>}, {transform_indices = @transform_2, window_bounds = array<i64: 16, 96>}]} {
    %c0_i32 = arith.constant 0 : i32
    %0 = arith.cmpi eq, %arg2, %c0_i32 : i32
    %1 = arith.extui %0 : i1 to i32
    %c0_i32_0 = arith.constant 0 : i32
    %2 = arith.cmpi ne, %1, %c0_i32_0 : i32
    scf.if %2 {
      %cst_10 = arith.constant 0.000000e+00 : f32
      %12 = vector.broadcast %cst_10 : f32 to vector<16x96xf32>
      %c0_11 = arith.constant 0 : index
      %c0_12 = arith.constant 0 : index
      %13 = vector.load %arg6[%c0_11, %c0_12] : memref<16x96xf32, #tpu.memory_space<vmem>>, vector<16x96xf32>
      tpu.vector_store %arg6[%c0_11, %c0_12], %12 {strides = array<i32>} : memref<16x96xf32, #tpu.memory_space<vmem>>, vector<16x96xf32>,
    } else {
    }
    %c0 = arith.constant 0 : index
    %c0_1 = arith.constant 0 : index
    %3 = vector.load %arg6[%c0, %c0_1] : memref<16x96xf32, #tpu.memory_space<vmem>>, vector<16x96xf32>
    %c0_2 = arith.constant 0 : index
    %c0_3 = arith.constant 0 : index
    %4 = vector.load %arg3[%c0_2, %c0_3] : memref<16x32xf32, #tpu.memory_space<vmem>>, vector<16x32xf32>
    %c0_4 = arith.constant 0 : index
    %c0_5 = arith.constant 0 : index
    %5 = vector.load %arg4[%c0_4, %c0_5] : memref<96x32xf32, #tpu.memory_space<vmem>>, vector<96x32xf32>
    %cst = arith.constant dense<0.000000e+00> : vector<16x96xf32>
    %6 = tpu.matmul %4, %5, %cst {dimension_numbers = #tpu.dot_dimension_numbers<[1], [1], [0], [0], [0, 0, 1, 0], [], []>} : vector<16x32xf32>, vector<96x32xf32>, vector<16x96xf32> -> vector<16x96xf32>
    %7 = arith.addf %3, %6 : vector<16x96xf32>
    %c0_6 = arith.constant 0 : index
    %c0_7 = arith.constant 0 : index
    %8 = vector.load %arg6[%c0_6, %c0_7] : memref<16x96xf32, #tpu.memory_space<vmem>>, vector<16x96xf32>
    tpu.vector_store %arg6[%c0_6, %c0_7], %7 {strides = array<i32>} : memref<16x96xf32, #tpu.memory_space<vmem>>, vector<16x96xf32>,
    %c0_i32_8 = arith.constant 0 : i32
    %9 = arith.cmpi eq, %arg2, %c0_i32_8 : i32
    %10 = arith.extui %9 : i1 to i32
    %c0_i32_9 = arith.constant 0 : i32
    %11 = arith.cmpi ne, %10, %c0_i32_9 : i32
    scf.if %11 {
      %c0_10 = arith.constant 0 : index
      %c0_11 = arith.constant 0 : index
      %12 = vector.load %arg6[%c0_10, %c0_11] : memref<16x96xf32, #tpu.memory_space<vmem>>, vector<16x96xf32>
      %c0_12 = arith.constant 0 : index
      %c0_13 = arith.constant 0 : index
      %13 = vector.load %arg5[%c0_12, %c0_13] : memref<16x96xf32, #tpu.memory_space<vmem>>, vector<16x96xf32>
      tpu.vector_store %arg5[%c0_12, %c0_13], %12 {strides = array<i32>} : memref<16x96xf32, #tpu.memory_space<vmem>>, vector<16x96xf32>,
    } else {
    }
    return
  }
  func.func @transform_0(%arg0: i32, %arg1: i32, %arg2: i32) -> (i32, i32) {
    %c0_i32 = arith.constant 0 : i32
    return %arg0, %arg2 : i32, i32
  }
  func.func @transform_1(%arg0: i32, %arg1: i32, %arg2: i32) -> (i32, i32) {
    %c0_i32 = arith.constant 0 : i32
    return %arg1, %arg2 : i32, i32
  }
  func.func @transform_2(%arg0: i32, %arg1: i32, %arg2: i32) -> (i32, i32) {
    %c0_i32 = arith.constant 0 : i32
    return %arg0, %arg1 : i32, i32
  }
}

</mosaic_0001>

<llo_original>
// kernel: tpu_custom_call.1
$region0: #{tpu_custom_call.1}
  #allocation0 [shape = 'u32[]', space=smem, size = 0x4, offset = 0x4, fixed_abs, tag = 'smem constant byte address 0x4 - core index']
  #allocation1 [shape = 'u32[144,128]{1,0:T(1,128)}', space=vmem, size = 0x12000, scoped, tag = 'internal scratch']
  #allocation2 [shape = 'f32[16,96]{1,0:T(8,128)}', space=vmem, size = 0x2000, scoped, tag = 'scratch operand']
  %s0 = inlined_call_operand.vmem [shape: f32[16,32], index: 0, kind: input, shape index: {}]
  %s1 = inlined_call_operand.vmem [shape: f32[96,32], index: 1, kind: input, shape index: {}]
  %s2 = inlined_call_operand.hbm [shape: f32[16,96], index: 2, kind: output, shape index: {}]
  %s3 = sld [smem:[#allocation0]]
  $region26: #{tpu_custom_call.1} parent=0
    _
  %s5 = ssub.s32 1, %s3
  %s6 = scalar_select 0, %s5, %s3
  $region1: #{tpu_custom_call.1} parent=0
    #allocation3 [shape = 'u8[8192]{0}', space=vmem, size = 0x2000, scoped, tag = 'output window, operand 0, single buffered']
    #allocation4 [shape = 's32[1]{0}', space=sflag, size = 0x4, scoped, tag = 'scoped memory for tpu_custom_call.1']
    %7 = vsyncpa [#allocation4], 0
    // Predicated region
    $region2: #{tpu_custom_call.1} parent=1 // pred_check
      _
    $region3: #{tpu_custom_call.1} parent=1 // pred_check_branch
      %9 = sbr.rel (0) target = $region5
    $region4: #{tpu_custom_call.1} parent=1 // pred_region
      _
    $region5: #{tpu_custom_call.1} parent=1 // pred_fallthru
      _
    // Predicated region
    $region6: #{tpu_custom_call.1} parent=1 // pred_check
      _
    $region7: #{tpu_custom_call.1} parent=1 // pred_check_branch
      %11 = sbr.rel (0) target = $region9
    $region8: #{tpu_custom_call.1} parent=1 // pred_region
      _
    $region9: #{tpu_custom_call.1} parent=1 // pred_fallthru
      _
    %p12 = scmp.eq.s32.totalorder 0, 0
    // Predicated region
    $region10: #{tpu_custom_call.1} parent=1 // pred_check
      %p13 = pneg %p12
    $region11: #{tpu_custom_call.1} parent=1 // pred_check_branch
      %15 = sbr.rel (%p13) target = $region13
    $region12: #{tpu_custom_call.1} parent=1 // pred_region
      %vm16 = vcmask 785408
      %17 = vst.msk [vmem:[#allocation2] sm:$0xff] %vm16, 0.0
      %18 = vst.msk [vmem:[#allocation2 + $0x8] sm:$0xff] %vm16, 0.0
    $region13: #{tpu_custom_call.1} parent=1 // pred_fallthru
      _
    %v19 = vld [vmem:[#allocation2] sm:$0xff]
    %v20 = vld [vmem:[#allocation2 + $0x8] sm:$0xff]
    %v21 = vld [vmem:[%s0] sm:$0xff]
    %v22 = vld [vmem:[%s0 + $0x8] sm:$0xff]
    %v23 = vld [vmem:[%s1] sm:$0xff]
    %v24 = vld [vmem:[%s1 + $0x8] sm:$0xff]
    %v25 = vld [vmem:[%s1 + $0x10] sm:$0xff]
    %v26 = vld [vmem:[%s1 + $0x18] sm:$0xff]
    %v27 = vld [vmem:[%s1 + $0x20] sm:$0xff]
    %v28 = vld [vmem:[%s1 + $0x28] sm:$0xff]
    %v29 = vld [vmem:[%s1 + $0x30] sm:$0xff]
    %v30 = vld [vmem:[%s1 + $0x38] sm:$0xff]
    %v31 = vld [vmem:[%s1 + $0x40] sm:$0xff]
    %v32 = vld [vmem:[%s1 + $0x48] sm:$0xff]
    %v33 = vld [vmem:[%s1 + $0x50] sm:$0xff]
    %v34 = vld [vmem:[%s1 + $0x58] sm:$0xff]
    %vm35 = vcmask 261120
    %v37 = vsel %vm35, %v21, 0
    %v40 = vsel %vm35, %v22, 0
    %v43 = vsel %vm35, %v23, 0
    %v46 = vsel %vm35, %v24, 0
    %v49 = vsel %vm35, %v25, 0
    %v52 = vsel %vm35, %v26, 0
    %v55 = vsel %vm35, %v27, 0
    %v58 = vsel %vm35, %v28, 0
    %v61 = vsel %vm35, %v29, 0
    %v64 = vsel %vm35, %v30, 0
    %v67 = vsel %vm35, %v31, 0
    %v70 = vsel %vm35, %v32, 0
    %v73 = vsel %vm35, %v33, 0
    %v76 = vsel %vm35, %v34, 0
    %78 = vmatprep.subr.mxu0 0.0
    %79 = vmatpush1.xpose.msra.mxu0 0.0
    %80 = vmatprep.subr.mxu0 0.0
    %81 = vmatpush1.xpose.msra.mxu0 0.0
    %82 = vmatprep.subr.mxu0 0.0
    %83 = vmatpush1.xpose.msra.mxu0 0.0
    %84 = vmatprep.subr.mxu0 0.0
    %85 = vmatpush1.xpose.msra.mxu0 0.0
    %86 = vmatprep.subr.mxu0 0.0
    %87 = vmatpush1.xpose.msra.mxu0 %v76
    %88 = vmatprep.subr.mxu0 0.0
    %89 = vmatpush1.xpose.msra.mxu0 %v73
    %90 = vmatprep.subr.mxu0 0.0
    %91 = vmatpush1.xpose.msra.mxu0 %v70
    %92 = vmatprep.subr.mxu0 0.0
    %93 = vmatpush1.xpose.msra.mxu0 %v67
    %94 = vmatprep.subr.mxu0 0.0
    %95 = vmatpush1.xpose.msra.mxu0 %v64
    %96 = vmatprep.subr.mxu0 0.0
    %97 = vmatpush1.xpose.msra.mxu0 %v61
    %98 = vmatprep.subr.mxu0 0.0
    %99 = vmatpush1.xpose.msra.mxu0 %v58
    %100 = vmatprep.subr.mxu0 0.0
    %101 = vmatpush1.xpose.msra.mxu0 %v55
    %102 = vmatprep.subr.mxu0 0.0
    %103 = vmatpush1.xpose.msra.mxu0 %v52
    %104 = vmatprep.subr.mxu0 0.0
    %105 = vmatpush1.xpose.msra.mxu0 %v49
    %106 = vmatprep.subr.mxu0 0.0
    %107 = vmatpush1.xpose.msra.mxu0 %v46
    %108 = vmatprep.subr.mxu0 0.0
    %109 = vmatpush1.xpose.msra.mxu0 %v43
    %110 = vmatprep.subr.mxu0 0.0
    %111 = vmatpush2.xpose.msra.mxu0 0.0
    %112 = vmatprep.subr.mxu0 0.0
    %113 = vmatpush2.xpose.msra.mxu0 0.0
    %114 = vmatprep.subr.mxu0 0.0
    %115 = vmatpush2.xpose.msra.mxu0 0.0
    %116 = vmatprep.subr.mxu0 0.0
    %117 = vmatpush2.xpose.msra.mxu0 0.0
    %118 = vmatprep.subr.mxu0 0.0
    %119 = vmatpush2.xpose.msra.mxu0 0.0
    %120 = vmatprep.subr.mxu0 0.0
    %121 = vmatpush2.xpose.msra.mxu0 0.0
    %122 = vmatprep.subr.mxu0 0.0
    %123 = vmatpush2.xpose.msra.mxu0 0.0
    %124 = vmatprep.subr.mxu0 0.0
    %125 = vmatpush2.xpose.msra.mxu0 0.0
    %126 = vmatprep.subr.mxu0 0.0
    %127 = vmatpush2.xpose.msra.mxu0 0.0
    %128 = vmatprep.subr.mxu0 0.0
    %129 = vmatpush2.xpose.msra.mxu0 0.0
    %130 = vmatprep.subr.mxu0 0.0
    %131 = vmatpush2.xpose.msra.mxu0 0.0
    %132 = vmatprep.subr.mxu0 0.0
    %133 = vmatpush2.xpose.msra.mxu0 0.0
    %134 = vmatprep.subr.mxu0 0.0
    %135 = vmatpush2.xpose.msra.mxu0 0.0
    %136 = vmatprep.subr.mxu0 0.0
    %137 = vmatpush2.xpose.msra.mxu0 0.0
    %138 = vmatprep.subr.mxu0 0.0
    %139 = vmatpush2.xpose.msra.mxu0 0.0
    %140 = vmatprep.subr.mxu0 0.0
    %141 = vmatpush2.xpose.msra.mxu0 0.0
    %142 = vmatprep.mubr.f32.mxu0 0.0
    %143 = vmatmul.mubr.f32.gmra.mxu0 %v37
    %v144 = vpop.f32.mrf.mxu0
    %v145 = vadd.f32 0.0, %v144
    %v146 = vpop.f32.mrf.mxu0
    %147 = vmatprep.mubr.f32.mxu0 0.0
    %148 = vmatmul.mubr.f32.gmra.mxu0 %v40
    %v149 = vpop.f32.mrf.mxu0
    %v150 = vadd.f32 0.0, %v149
    %v151 = vpop.f32.mrf.mxu0
    %152 = vdwg.mxu0
    %v153 = vadd.f32 %v19, %v145
    %v154 = vadd.f32 %v20, %v150
    %vm155 = vcmask 785408
    %156 = vst.msk [vmem:[#allocation2] sm:$0xff] %vm155, %v153
    %157 = vst.msk [vmem:[#allocation2 + $0x8] sm:$0xff] %vm155, %v154
    // Predicated region
    $region14: #{tpu_custom_call.1} parent=1 // pred_check
      %p158 = pneg %p12
    $region15: #{tpu_custom_call.1} parent=1 // pred_check_branch
      %160 = sbr.rel (%p158) target = $region17
    $region16: #{tpu_custom_call.1} parent=1 // pred_region
      %v161 = vld [vmem:[#allocation2] sm:$0xff]
      %v162 = vld [vmem:[#allocation2 + $0x8] sm:$0xff]
      %163 = vst.msk [vmem:[#allocation3] sm:$0xff] %vm155, %v161
      %164 = vst.msk [vmem:[#allocation3 + $0x8] sm:$0xff] %vm155, %v162
    $region17: #{tpu_custom_call.1} parent=1 // pred_fallthru
      _
    // Predicated region
    $region18: #{tpu_custom_call.1} parent=1 // pred_check
      _
    $region19: #{tpu_custom_call.1} parent=1 // pred_check_branch
      %166 = sbr.rel (0) target = $region21
    $region20: #{tpu_custom_call.1} parent=1 // pred_region
      %s168 = ssub.s32 256, 256
      %169 = vsyncadd [#allocation4], %s168
      %s170 = sshll.u32 [#allocation3], 4
      %s171 = int_to_ptr.vmem [resolvable:$true] %s170
      %176 = dma.vmem_to_hbm [thread:$0]  %s171, 256, %s2, [#allocation4], 128, 128, 8
    $region21: #{tpu_custom_call.1} parent=1 // pred_fallthru
      _
    // Predicated region
    $region22: #{tpu_custom_call.1} parent=1 // pred_check
      _
    $region23: #{tpu_custom_call.1} parent=1 // pred_check_branch
      %178 = sbr.rel (0) target = $region25
    $region24: #{tpu_custom_call.1} parent=1 // pred_region
      %179 = dma.done [#allocation4], 256
    $region25: #{tpu_custom_call.1} parent=1 // pred_fallthru
      _
    %180 = vsyncpa [#allocation4], 1

</llo_original>
